<compile_context>
chip_gen: v7x
topology: tpu7x:2x2x1
jax: 0.10.0
libtpu: 0.0.40
codegen_flags: <defaults>
</compile_context>

<pallas_src>
from functools import partial

import jax
import jax.numpy as jnp
from jax.experimental import pallas as pl
from jax.experimental.pallas import tpu as pltpu


def policy_net_kernel(x_ref, w1_ref, b1_ref, w2_ref, b2_ref, out_ref):
    x = x_ref[...]          # (TB, K)   f32
    w1 = w1_ref[...]        # (K, Hp)   f32

    # fc1 as K VPU broadcast-FMAs (K is tiny; avoids MXU push/pop for a (TBx4)@(4xHp) dot).
    acc = x[:, 0:1] * w1[0:1, :]
    for k in range(1, x.shape[1]):           # static unroll, K is small (4)
        acc = acc + x[:, k : k + 1] * w1[k : k + 1, :]
    h = jnp.maximum(acc + b1_ref[...], 0.0)  # (TB, Hp) f32; padded columns are exactly 0

    # fc2 on the MXU: bf16 operands (v6e/v7x native), f32 accumulation.
    logits = jnp.dot(
        h.astype(w2_ref.dtype), w2_ref[...], preferred_element_type=jnp.float32
    )
    logits = logits + b2_ref[...]            # padded lanes carry -1e30 -> exp() == 0

    # Numerically-stable softmax over the (lane-dense, padded) feature axis.
    m = jnp.max(logits, axis=1, keepdims=True)
    e = jnp.exp(logits - m)
    denom = jnp.sum(e, axis=1, keepdims=True)
    inv = pl.reciprocal(denom, approx=True)   # EUP slot instead of a VALU divide
    inv = inv * (2.0 - denom * inv)           # one Newton step -> ~f32-accurate 1/denom
    out_ref[...] = (e * inv).astype(out_ref.dtype)


@partial(jax.jit, static_argnames=("block_b", "matmul_dtype"))
def policy_net_forward(x, w1, b1, w2, b2, *, block_b=512, matmul_dtype=jnp.bfloat16):
    """y = softmax(relu(x @ w1 + b1) @ w2 + b2, axis=1)  — PyTorch PolicyNet.forward.

    x:  (B, input_dim) f32
    w1: (input_dim, hidden_dim), b1: (hidden_dim,) or (1, hidden_dim)
    w2: (hidden_dim, output_dim), b2: (output_dim,) or (1, output_dim)
    """
    B, K = x.shape
    H = w1.shape[1]
    O = w2.shape[1]
    LANE = 128
    Hp = pl.cdiv(H, LANE) * LANE
    Op = pl.cdiv(O, LANE) * LANE

    # Batch tile: multiple of 8 (sublane), big enough to amortize the ~0.35 us/step
    # overhead, small enough that double-buffered blocks stay well under scoped VMEM.
    tb = block_b if B >= block_b else pl.cdiv(B, 8) * 8
    Bp = pl.cdiv(B, tb) * tb

    f32 = jnp.float32
    xp = jnp.zeros((Bp, K), f32).at[:B, :].set(x.astype(f32))
    w1p = jnp.zeros((K, Hp), f32).at[:, :H].set(w1.astype(f32))
    b1p = jnp.zeros((1, Hp), f32).at[:, :H].set(jnp.reshape(b1, (1, H)).astype(f32))
    # bf16 matmul operand (f32 accumulate in-kernel); padded rows/cols are zero.
    w2p = jnp.zeros((Hp, Op), matmul_dtype).at[:H, :O].set(w2.astype(matmul_dtype))
    # Padded output lanes get a huge negative bias so softmax ignores them.
    b2p = jnp.full((1, Op), -1e30, f32).at[:, :O].set(jnp.reshape(b2, (1, O)).astype(f32))

    out_padded = pl.pallas_call(
        policy_net_kernel,
        out_shape=jax.ShapeDtypeStruct((Bp, Op), jnp.float32),
        grid_spec=pltpu.PrefetchScalarGridSpec(
            num_scalar_prefetch=0,
            grid=(Bp // tb,),
            in_specs=[
                pl.BlockSpec((tb, K), lambda i: (i, 0)),     # x: tiled over batch
                pl.BlockSpec((K, Hp), lambda i: (0, 0)),     # weights: VMEM-resident
                pl.BlockSpec((1, Hp), lambda i: (0, 0)),
                pl.BlockSpec((Hp, Op), lambda i: (0, 0)),
                pl.BlockSpec((1, Op), lambda i: (0, 0)),
            ],
            out_specs=pl.BlockSpec((tb, Op), lambda i: (i, 0)),
        ),
        compiler_params=pltpu.CompilerParams(
            dimension_semantics=("parallel",),
        ),
    )(xp, w1p, b1p, w2p, b2p)

    return out_padded[:B, :O]


def init_params(key, input_dim, hidden_dim, output_dim):
    # Mimic torch.nn.Linear default init: U(-1/sqrt(fan_in), 1/sqrt(fan_in)).
    k1, k2, k3, k4 = jax.random.split(key, 4)
    lim1 = 1.0 / jnp.sqrt(input_dim)
    lim2 = 1.0 / jnp.sqrt(hidden_dim)
    w1 = jax.random.uniform(k1, (input_dim, hidden_dim), jnp.float32, -lim1, lim1)
    b1 = jax.random.uniform(k2, (hidden_dim,), jnp.float32, -lim1, lim1)
    w2 = jax.random.uniform(k3, (hidden_dim, output_dim), jnp.float32, -lim2, lim2)
    b2 = jax.random.uniform(k4, (output_dim,), jnp.float32, -lim2, lim2)
    return w1, b1, w2, b2


if __name__ == "__main__":
    # CartPole-v0: obs dim 4, action dim 2; hidden 32, small batch 8.
    input_dim, hidden_dim, output_dim = 4, 32, 2
    batch = 8

    key = jax.random.PRNGKey(0)
    kx, kp = jax.random.split(key)
    x = jax.random.normal(kx, (batch, input_dim), jnp.float32)
    w1, b1, w2, b2 = init_params(kp, input_dim, hidden_dim, output_dim)

    probs = policy_net_forward(x, w1, b1, w2, b2)
    jax.block_until_ready(probs)

    # Pure-JAX f32 reference (PyTorch forward semantics).
    h_ref = jnp.maximum(x @ w1 + b1[None, :], 0.0)
    logits_ref = h_ref @ w2 + b2[None, :]
    ref = jax.nn.softmax(logits_ref, axis=1)

    assert probs.shape == (batch, output_dim)
    # bf16 MXU operands on fc2 -> allow a few e-3 of slack vs the f32 reference.
    assert jnp.allclose(probs, ref, atol=5e-3, rtol=5e-3), float(jnp.max(jnp.abs(probs - ref)))
    assert jnp.allclose(jnp.sum(probs, axis=1), 1.0, atol=1e-4)

    print("KERNEL_OK")
</pallas_src>

<mosaic_0001>
module attributes {stable_mosaic.version = 11 : i64} {
  func.func @policy_net_kernel(%arg0: i32, %arg1: memref<8x4xf32, #tpu.memory_space<vmem>>, %arg2: memref<4x128xf32, #tpu.memory_space<vmem>>, %arg3: memref<1x128xf32, #tpu.memory_space<vmem>>, %arg4: memref<128x128xbf16, #tpu.memory_space<vmem>>, %arg5: memref<1x128xf32, #tpu.memory_space<vmem>>, %arg6: memref<8x128xf32, #tpu.memory_space<vmem>>) attributes {dimension_semantics = [#tpu.dimension_semantics<parallel>], iteration_bounds = array<i64: 1>, scalar_prefetch = 0 : i64, scratch_operands = 0 : i64, tpu.core_type = #tpu.core_type<tc>, window_params = [{transform_indices = @transform_0, window_bounds = array<i64: 8, 4>}, {pipeline_mode = #tpu.pipeline_mode<synchronous>, transform_indices = @transform_1, window_bounds = array<i64: 4, 128>}, {pipeline_mode = #tpu.pipeline_mode<synchronous>, transform_indices = @transform_2, window_bounds = array<i64: 1, 128>}, {pipeline_mode = #tpu.pipeline_mode<synchronous>, transform_indices = @transform_3, window_bounds = array<i64: 128, 128>}, {pipeline_mode = #tpu.pipeline_mode<synchronous>, transform_indices = @transform_4, window_bounds = array<i64: 1, 128>}, {transform_indices = @transform_5, window_bounds = array<i64: 8, 128>}]} {
    %c0 = arith.constant 0 : index
    %c0_0 = arith.constant 0 : index
    %0 = vector.load %arg1[%c0, %c0_0] : memref<8x4xf32, #tpu.memory_space<vmem>>, vector<8x4xf32>
    %c0_1 = arith.constant 0 : index
    %c0_2 = arith.constant 0 : index
    %1 = vector.load %arg2[%c0_1, %c0_2] : memref<4x128xf32, #tpu.memory_space<vmem>>, vector<4x128xf32>
    %2 = vector.extract_strided_slice %0 {offsets = [0, 0], sizes = [8, 1], strides = [1, 1]} : vector<8x4xf32> to vector<8x1xf32>
    %3 = vector.extract_strided_slice %1 {offsets = [0, 0], sizes = [1, 128], strides = [1, 1]} : vector<4x128xf32> to vector<1x128xf32>
    %4 = vector.broadcast %2 : vector<8x1xf32> to vector<8x128xf32>
    %5 = vector.broadcast %3 : vector<1x128xf32> to vector<8x128xf32>
    %6 = arith.mulf %4, %5 : vector<8x128xf32>
    %7 = vector.extract_strided_slice %0 {offsets = [0, 1], sizes = [8, 1], strides = [1, 1]} : vector<8x4xf32> to vector<8x1xf32>
    %8 = vector.extract_strided_slice %1 {offsets = [1, 0], sizes = [1, 128], strides = [1, 1]} : vector<4x128xf32> to vector<1x128xf32>
    %9 = vector.broadcast %7 : vector<8x1xf32> to vector<8x128xf32>
    %10 = vector.broadcast %8 : vector<1x128xf32> to vector<8x128xf32>
    %11 = arith.mulf %9, %10 : vector<8x128xf32>
    %12 = arith.addf %6, %11 : vector<8x128xf32>
    %13 = vector.extract_strided_slice %0 {offsets = [0, 2], sizes = [8, 1], strides = [1, 1]} : vector<8x4xf32> to vector<8x1xf32>
    %14 = vector.extract_strided_slice %1 {offsets = [2, 0], sizes = [1, 128], strides = [1, 1]} : vector<4x128xf32> to vector<1x128xf32>
    %15 = vector.broadcast %13 : vector<8x1xf32> to vector<8x128xf32>
    %16 = vector.broadcast %14 : vector<1x128xf32> to vector<8x128xf32>
    %17 = arith.mulf %15, %16 : vector<8x128xf32>
    %18 = arith.addf %12, %17 : vector<8x128xf32>
    %19 = vector.extract_strided_slice %0 {offsets = [0, 3], sizes = [8, 1], strides = [1, 1]} : vector<8x4xf32> to vector<8x1xf32>
    %20 = vector.extract_strided_slice %1 {offsets = [3, 0], sizes = [1, 128], strides = [1, 1]} : vector<4x128xf32> to vector<1x128xf32>
    %21 = vector.broadcast %19 : vector<8x1xf32> to vector<8x128xf32>
    %22 = vector.broadcast %20 : vector<1x128xf32> to vector<8x128xf32>
    %23 = arith.mulf %21, %22 : vector<8x128xf32>
    %24 = arith.addf %18, %23 : vector<8x128xf32>
    %c0_3 = arith.constant 0 : index
    %c0_4 = arith.constant 0 : index
    %25 = vector.load %arg3[%c0_3, %c0_4] : memref<1x128xf32, #tpu.memory_space<vmem>>, vector<1x128xf32>
    %26 = vector.broadcast %25 : vector<1x128xf32> to vector<8x128xf32>
    %27 = arith.addf %24, %26 : vector<8x128xf32>
    %cst = arith.constant 0.000000e+00 : f32
    %28 = vector.broadcast %cst : f32 to vector<8x128xf32>
    %29 = arith.maximumf %27, %28 : vector<8x128xf32>
    %30 = arith.truncf %29 : vector<8x128xf32> to vector<8x128xbf16>
    %c0_5 = arith.constant 0 : index
    %c0_6 = arith.constant 0 : index
    %31 = vector.load %arg4[%c0_5, %c0_6] : memref<128x128xbf16, #tpu.memory_space<vmem>>, vector<128x128xbf16>
    %cst_7 = arith.constant dense<0.000000e+00> : vector<8x128xf32>
    %32 = tpu.matmul %30, %31, %cst_7 {dimension_numbers = #tpu.dot_dimension_numbers<[1], [0], [0], [1], [0, 0, 1, 1], [], []>} : vector<8x128xbf16>, vector<128x128xbf16>, vector<8x128xf32> -> vector<8x128xf32>
    %c0_8 = arith.constant 0 : index
    %c0_9 = arith.constant 0 : index
    %33 = vector.load %arg5[%c0_8, %c0_9] : memref<1x128xf32, #tpu.memory_space<vmem>>, vector<1x128xf32>
    %34 = vector.broadcast %33 : vector<1x128xf32> to vector<8x128xf32>
    %35 = arith.addf %32, %34 : vector<8x128xf32>
    %cst_10 = arith.constant dense<0xFF800000> : vector<8xf32>
    %36 = vector.multi_reduction <maximumf>, %35, %cst_10 [1] : vector<8x128xf32> to vector<8xf32>
    %37 = vector.shape_cast %36 : vector<8xf32> to vector<8x1xf32>
    %38 = vector.broadcast %37 : vector<8x1xf32> to vector<8x128xf32>
    %39 = arith.subf %35, %38 : vector<8x128xf32>
    %40 = math.exp %39 : vector<8x128xf32>
    %cst_11 = arith.constant dense<0.000000e+00> : vector<8xf32>
    %41 = vector.multi_reduction <add>, %40, %cst_11 [1] : vector<8x128xf32> to vector<8xf32>
    %42 = vector.shape_cast %41 : vector<8xf32> to vector<8x1xf32>
    %43 = tpu.reciprocal %42 {approx = true} : vector<8x1xf32> -> vector<8x1xf32>
    %44 = arith.mulf %42, %43 : vector<8x1xf32>
    %cst_12 = arith.constant 2.000000e+00 : f32
    %45 = vector.broadcast %cst_12 : f32 to vector<8x1xf32>
    %46 = arith.subf %45, %44 : vector<8x1xf32>
    %47 = arith.mulf %43, %46 : vector<8x1xf32>
    %48 = vector.broadcast %47 : vector<8x1xf32> to vector<8x128xf32>
    %49 = arith.mulf %40, %48 : vector<8x128xf32>
    %c0_13 = arith.constant 0 : index
    %c0_14 = arith.constant 0 : index
    %50 = vector.load %arg6[%c0_13, %c0_14] : memref<8x128xf32, #tpu.memory_space<vmem>>, vector<8x128xf32>
    tpu.vector_store %arg6[%c0_13, %c0_14], %49 {strides = array<i32>} : memref<8x128xf32, #tpu.memory_space<vmem>>, vector<8x128xf32>,
    return
  }
  func.func @transform_0(%arg0: i32) -> (i32, i32) {
    %c0_i32 = arith.constant 0 : i32
    %c0_i32_0 = arith.constant 0 : i32
    return %arg0, %c0_i32 : i32, i32
  }
  func.func @transform_1(%arg0: i32) -> (i32, i32) {
    %c0_i32 = arith.constant 0 : i32
    %c0_i32_0 = arith.constant 0 : i32
    %c0_i32_1 = arith.constant 0 : i32
    return %c0_i32, %c0_i32_0 : i32, i32
  }
  func.func @transform_2(%arg0: i32) -> (i32, i32) {
    %c0_i32 = arith.constant 0 : i32
    %c0_i32_0 = arith.constant 0 : i32
    %c0_i32_1 = arith.constant 0 : i32
    return %c0_i32, %c0_i32_0 : i32, i32
  }
  func.func @transform_3(%arg0: i32) -> (i32, i32) {
    %c0_i32 = arith.constant 0 : i32
    %c0_i32_0 = arith.constant 0 : i32
    %c0_i32_1 = arith.constant 0 : i32
    return %c0_i32, %c0_i32_0 : i32, i32
  }
  func.func @transform_4(%arg0: i32) -> (i32, i32) {
    %c0_i32 = arith.constant 0 : i32
    %c0_i32_0 = arith.constant 0 : i32
    %c0_i32_1 = arith.constant 0 : i32
    return %c0_i32, %c0_i32_0 : i32, i32
  }
  func.func @transform_5(%arg0: i32) -> (i32, i32) {
    %c0_i32 = arith.constant 0 : i32
    %c0_i32_0 = arith.constant 0 : i32
    return %arg0, %c0_i32 : i32, i32
  }
}

</mosaic_0001>

<llo_original>
// kernel: policy_net_forward.1
$region0: #{policy_net_forward.1}
  #allocation0 [shape = 'u32[]', space=smem, size = 0x4, offset = 0x4, fixed_abs, tag = 'smem constant byte address 0x4 - core index']
  #allocation1 [shape = 'u32[144,128]{1,0:T(1,128)}', space=vmem, size = 0x12000, scoped, tag = 'internal scratch']
  %s0 = inlined_call_operand.vmem [shape: f32[8,4], index: 0, kind: input, shape index: {}]
  %s1 = inlined_call_operand.vmem [shape: f32[4,128], index: 1, kind: input, shape index: {}]
  %s2 = inlined_call_operand.vmem [shape: f32[1,128], index: 2, kind: input, shape index: {}]
  %s3 = inlined_call_operand.vmem [shape: bf16[128,128], index: 3, kind: input, shape index: {}]
  %s4 = inlined_call_operand.vmem [shape: f32[1,128], index: 4, kind: input, shape index: {}]
  %s5 = inlined_call_operand.vmem [shape: f32[8,128], index: 5, kind: output, shape index: {}]
  %s6 = sld [smem:[#allocation0]]
  $region30: #{policy_net_forward.1} parent=0
    _
  %s8 = ssub.s32 1, %s6
  %s9 = scalar_select 0, %s8, %s6
  // Predicated region
  $region2: #{policy_net_forward.1} parent=0 // pred_check
    _
  $region3: #{policy_net_forward.1} parent=0 // pred_check_branch
    %11 = sbr.rel (0) target = $region5
  $region4: #{policy_net_forward.1} parent=0 // pred_region
    _
  $region5: #{policy_net_forward.1} parent=0 // pred_fallthru
    _
  // Predicated region
  $region6: #{policy_net_forward.1} parent=0 // pred_check
    _
  $region7: #{policy_net_forward.1} parent=0 // pred_check_branch
    %13 = sbr.rel (0) target = $region9
  $region8: #{policy_net_forward.1} parent=0 // pred_region
    _
  $region9: #{policy_net_forward.1} parent=0 // pred_fallthru
    _
  // Predicated region
  $region10: #{policy_net_forward.1} parent=0 // pred_check
    _
  $region11: #{policy_net_forward.1} parent=0 // pred_check_branch
    %15 = sbr.rel (0) target = $region13
  $region12: #{policy_net_forward.1} parent=0 // pred_region
    _
  $region13: #{policy_net_forward.1} parent=0 // pred_fallthru
    _
  // Predicated region
  $region14: #{policy_net_forward.1} parent=0 // pred_check
    _
  $region15: #{policy_net_forward.1} parent=0 // pred_check_branch
    %17 = sbr.rel (0) target = $region17
  $region16: #{policy_net_forward.1} parent=0 // pred_region
    _
  $region17: #{policy_net_forward.1} parent=0 // pred_fallthru
    _
  // Predicated region
  $region18: #{policy_net_forward.1} parent=0 // pred_check
    _
  $region19: #{policy_net_forward.1} parent=0 // pred_check_branch
    %19 = sbr.rel (0) target = $region21
  $region20: #{policy_net_forward.1} parent=0 // pred_region
    _
  $region21: #{policy_net_forward.1} parent=0 // pred_fallthru
    _
  %v21 = vld [vmem:[%s0] sm:$0xff]
  %v22 = vld [vmem:[%s1] sm:$0xf]
  %24 = vset.pattern.permute.xlu0 0
  %25 = vperm.xlu0 %24, %v21
  %v26 = vpop.permute.xlu0 %25
  %v28 = vlaneseq
  %v29 = vshrl.u32 %v28, 7
  %v30 = vsub.s32 0, %v29
  %v31 = vrot.slane %v22, %v30
  %v32 = vmul.f32 %v26, %v31
  %33 = vset.pattern.permute.xlu0 1
  %34 = vperm.xlu0 %33, %v21
  %v35 = vpop.permute.xlu0 %34
  %v37 = vlaneseq
  %v38 = vshrl.u32 %v37, 7
  %v39 = vsub.s32 1, %v38
  %v40 = vrot.slane %v22, %v39
  %v41 = vmul.f32 %v35, %v40
  %v42 = vadd.f32 %v32, %v41
  %43 = vset.pattern.permute.xlu0 2
  %44 = vperm.xlu0 %43, %v21
  %v45 = vpop.permute.xlu0 %44
  %v47 = vlaneseq
  %v48 = vshrl.u32 %v47, 7
  %v49 = vsub.s32 2, %v48
  %v50 = vrot.slane %v22, %v49
  %v51 = vmul.f32 %v45, %v50
  %v52 = vadd.f32 %v42, %v51
  %53 = vset.pattern.permute.xlu0 3
  %54 = vperm.xlu0 %53, %v21
  %v55 = vpop.permute.xlu0 %54
  %v57 = vlaneseq
  %v58 = vshrl.u32 %v57, 7
  %v59 = vsub.s32 3, %v58
  %v60 = vrot.slane %v22, %v59
  %v61 = vmul.f32 %v55, %v60
  %v62 = vadd.f32 %v52, %v61
  %v63 = vld [vmem:[%s2] sm:$0x1]
  %v65 = vlaneseq
  %v66 = vshrl.u32 %v65, 7
  %v67 = vsub.s32 0, %v66
  %v68 = vrot.slane %v63, %v67
  %v70 = vadd.f32 %v62, %v68
  %v71 = vmax.f32 %v70, 0.0
  %v72 = vpack.c.bf16 %v71, %v71
  %v73 = vld [vmem:[%s3] sm:$0xf]
  %v74 = vld [vmem:[%s3 + $0x4] sm:$0xf]
  %v75 = vld [vmem:[%s3 + $0x8] sm:$0xf]
  %v76 = vld [vmem:[%s3 + $0xc] sm:$0xf]
  %v77 = vld [vmem:[%s3 + $0x10] sm:$0xf]
  %v78 = vld [vmem:[%s3 + $0x14] sm:$0xf]
  %v79 = vld [vmem:[%s3 + $0x18] sm:$0xf]
  %v80 = vld [vmem:[%s3 + $0x1c] sm:$0xf]
  %v81 = vld [vmem:[%s3 + $0x20] sm:$0xf]
  %v82 = vld [vmem:[%s3 + $0x24] sm:$0xf]
  %v83 = vld [vmem:[%s3 + $0x28] sm:$0xf]
  %v84 = vld [vmem:[%s3 + $0x2c] sm:$0xf]
  %v85 = vld [vmem:[%s3 + $0x30] sm:$0xf]
  %v86 = vld [vmem:[%s3 + $0x34] sm:$0xf]
  %v87 = vld [vmem:[%s3 + $0x38] sm:$0xf]
  %v88 = vld [vmem:[%s3 + $0x3c] sm:$0xf]
  %v89 = vld [vmem:[%s4] sm:$0x1]
  %v91 = vlaneseq
  %v92 = vshrl.u32 %v91, 7
  %v93 = vsub.s32 0, %v92
  %v94 = vrot.slane %v89, %v93
  %v112 = vunpack.c.l.b16 %v73
  %v113 = vunpack.c.l.b16 %v74
  %v114 = vunpack.c.l.b16 %v75
  %v115 = vunpack.c.l.b16 %v76
  %v116 = vunpack.c.l.b16 %v77
  %v117 = vunpack.c.l.b16 %v78
  %v118 = vunpack.c.l.b16 %v79
  %v119 = vunpack.c.l.b16 %v80
  %v120 = vunpack.c.l.b16 %v81
  %v121 = vunpack.c.l.b16 %v82
  %v122 = vunpack.c.l.b16 %v83
  %v123 = vunpack.c.l.b16 %v84
  %v124 = vunpack.c.l.b16 %v85
  %v125 = vunpack.c.l.b16 %v86
  %v126 = vunpack.c.l.b16 %v87
  %v127 = vunpack.c.l.b16 %v88
  %v128 = vpack.c.b16 %v113, %v112
  %v129 = vpack.c.b16 %v115, %v114
  %v130 = vpack.c.b16 %v117, %v116
  %v131 = vpack.c.b16 %v119, %v118
  %v132 = vpack.c.b16 %v121, %v120
  %v133 = vpack.c.b16 %v123, %v122
  %v134 = vpack.c.b16 %v125, %v124
  %v135 = vpack.c.b16 %v127, %v126
  %144 = vmatprep.subr.bf16.mxu0 0
  %145 = vmatpush1.bf16.msra.mxu0 %v128
  %146 = vmatprep.subr.bf16.mxu0 0
  %147 = vmatpush1.bf16.msra.mxu0 %v129
  %148 = vmatprep.subr.bf16.mxu0 0
  %149 = vmatpush1.bf16.msra.mxu0 %v130
  %150 = vmatprep.subr.bf16.mxu0 0
  %151 = vmatpush1.bf16.msra.mxu0 %v131
  %152 = vmatprep.subr.bf16.mxu0 0
  %153 = vmatpush1.bf16.msra.mxu0 %v132
  %154 = vmatprep.subr.bf16.mxu0 0
  %155 = vmatpush1.bf16.msra.mxu0 %v133
  %156 = vmatprep.subr.bf16.mxu0 0
  %157 = vmatpush1.bf16.msra.mxu0 %v134
  %158 = vmatprep.subr.bf16.mxu0 0
  %159 = vmatpush1.bf16.msra.mxu0 %v135
  %160 = vmatprep.subr.bf16.mxu0 0
  %161 = vmatpush1.bf16.msra.mxu0 0
  %162 = vmatprep.subr.bf16.mxu0 0
  %163 = vmatpush1.bf16.msra.mxu0 0
  %164 = vmatprep.subr.bf16.mxu0 0
  %165 = vmatpush1.bf16.msra.mxu0 0
  %166 = vmatprep.subr.bf16.mxu0 0
  %167 = vmatpush1.bf16.msra.mxu0 0
  %168 = vmatprep.subr.bf16.mxu0 0
  %169 = vmatpush1.bf16.msra.mxu0 0
  %170 = vmatprep.subr.bf16.mxu0 0
  %171 = vmatpush1.bf16.msra.mxu0 0
  %172 = vmatprep.subr.bf16.mxu0 0
  %173 = vmatpush1.bf16.msra.mxu0 0
  %174 = vmatprep.subr.bf16.mxu0 0
  %175 = vmatpush1.bf16.msra.mxu0 0
  %176 = vmatprep.mubr.bf16.mxu0 0
  %177 = vmatmul.mubr.bf16.gmra.mrb[0].mxu0 %v72
  %v178 = vpop.f32.mrb[0].mxu0
  %v179 = vadd.f32 %v94, %v178
  %v180 = vpop.f32.mrb[0].mxu0
  %v181 = vpop.f32.mrb[0].mxu0
  %v182 = vpop.f32.mrb[0].mxu0
  %183 = vdwg.mxu0
  %184 = vmax.xlane.f32.xlu0 %v179
  %v185 = vpop.xlane.xlu0 %184
  %v186 = vsub.f32 %v179, %v185
  %v187 = vmul.f32 %v186, 1.442695
  %v188 = vpow.pop %v187
  %189 = vadd.xlane.f32.xlu0 %v188
  %v190 = vpop.xlane.xlu0 %189
  %v191 = vrcp.pop %v190
  %v192 = vmul.f32 %v190, %v191
  %v193 = vsub.f32 2.0, %v192
  %v194 = vmul.f32 %v191, %v193
  %v195 = vmul.f32 %v188, %v194
  %196 = vst [vmem:[%s5] sm:$0xff] %v195
  // Predicated region
  $region22: #{policy_net_forward.1} parent=0 // pred_check
    _
  $region23: #{policy_net_forward.1} parent=0 // pred_check_branch
    %198 = sbr.rel (0) target = $region25
  $region24: #{policy_net_forward.1} parent=0 // pred_region
    _
  $region25: #{policy_net_forward.1} parent=0 // pred_fallthru
    _
  // Predicated region
  $region26: #{policy_net_forward.1} parent=0 // pred_check
    _
  $region27: #{policy_net_forward.1} parent=0 // pred_check_branch
    %200 = sbr.rel (0) target = $region29
  $region28: #{policy_net_forward.1} parent=0 // pred_region
    _
  $region29: #{policy_net_forward.1} parent=0 // pred_fallthru
    _

</llo_original>
